<compile_context>
chip_gen: v5e
topology: v5e:2x2
jax: 0.10.0
libtpu: 0.0.40
codegen_flags: <defaults>
</compile_context>

<pallas_src>
import functools

import jax
import jax.numpy as jnp
from jax.experimental import pallas as pl
from jax.experimental.pallas import tpu as pltpu


def _full_spec(shape):
    nd = len(shape)
    return pl.BlockSpec(shape, lambda i, nd=nd: (0,) * nd)


def _blockdiag(blocks):
    rows = sum(b.shape[0] for b in blocks)
    cols = sum(b.shape[1] for b in blocks)
    out = jnp.zeros((rows, cols), jnp.float32)
    r = c = 0
    for b in blocks:
        out = out.at[r:r + b.shape[0], c:c + b.shape[1]].set(b)
        r += b.shape[0]
        c += b.shape[1]
    return out


# --------------------------------------------------------------------------
# Fused kernel: RGCNConv + TransformerConv(2 heads) + BatchNorm1d(train) + LeakyReLU
# --------------------------------------------------------------------------
def fused_gnn_kernel(adj2_ref, xbd2_ref, wstk2_ref, wproj_ref, cb_ref, bn_ref, out_ref,
                     *, n, heads, head_dim, out_attn, eps, slope):
    n2 = heads * n
    hd = head_dim

    # ---- RGCN (both heads' copies at once: block-diagonal inputs => hbd = diag(h, h))
    msgs2 = jnp.dot(xbd2_ref[...], wstk2_ref[...], preferred_element_type=jnp.float32)
    hbd = jnp.dot(adj2_ref[...], msgs2, preferred_element_type=jnp.float32)   # (2n, 2*h1)

    # ---- Fused per-head-stacked q/k/v/skip projection (scale + all biases pre-folded)
    cnt2 = cb_ref[:, 0:n2]                            # (2n, 2n) blockdiag(cnt, cnt)
    b_proj = cb_ref[:, n2:n2 + 4 * hd]                # (2n, 4*hd) per-row folded biases
    qkvs = jnp.dot(hbd, wproj_ref[...], preferred_element_type=jnp.float32) + b_proj

    q2 = qkvs[:, 0:hd]                                # (2n, hd)  rows 0:n head0, n:2n head1
    k2 = qkvs[:, hd:2 * hd]
    v2 = qkvs[:, 2 * hd:3 * hd]
    skip2 = qkvs[:, 3 * hd:4 * hd]

    # ---- Both-heads attention in one pass (cnt2 zeroes cross-head and non-edge scores)
    s = jnp.dot(q2, k2.T, preferred_element_type=jnp.float32)       # (2n, 2n)
    m = jnp.max(s, axis=-1, keepdims=True)
    p = jnp.exp(s - m) * cnt2                         # multiplicity-weighted numerator
    denom = jnp.sum(p, axis=-1, keepdims=True)
    agg2 = jnp.dot(p, v2, preferred_element_type=jnp.float32)       # (2n, hd)
    # Isolated nodes: p-row == 0 -> agg2 row == 0, so 0 * (1/eps) == 0; no select needed.
    y2 = agg2 * pl.reciprocal(jnp.maximum(denom, 1e-30), approx=True) + skip2

    # ---- De-stack heads (sublane-aligned slices) -> (n, out_attn)
    attn = jnp.concatenate([y2[h * n:(h + 1) * n, :] for h in range(heads)], axis=-1)

    # ---- BatchNorm1d (training stats, one pass) + LeakyReLU(slope)
    inv_n = 1.0 / n
    mean = jnp.sum(attn, axis=0, keepdims=True) * inv_n
    var = jnp.sum(attn * attn, axis=0, keepdims=True) * inv_n - mean * mean
    gamma = bn_ref[:, 0:out_attn]
    beta = bn_ref[:, out_attn:2 * out_attn]
    y = (attn - mean) * jax.lax.rsqrt(var + eps) * gamma + beta
    out_ref[...] = jnp.where(y > 0.0, y, slope * y)


# --------------------------------------------------------------------------
# Full GNN forward: graph preprocessing + weight packing in plain JAX,
# all node-feature math in the single fused Pallas kernel.
# --------------------------------------------------------------------------
def gnn_forward(params, node_features, node_type, edge_index, edge_type,
                *, num_relations, heads, head_dim):
    del node_type  # unused by the reference forward
    n, _g = node_features.shape
    h1 = params["w_root"].shape[1]
    out_attn = heads * head_dim
    src, dst = edge_index[0], edge_index[1]

    # Dense per-relation adjacency with mean normalization (RGCN aggr='mean'),
    # with I_N prepended so the root term rides the same aggregation matmul.
    adj = jnp.zeros((num_relations, n, n), jnp.float32).at[edge_type, dst, src].add(1.0)
    adj_norm = adj / jnp.maximum(adj.sum(axis=-1, keepdims=True), 1.0)
    adj_cat = jnp.transpose(adj_norm, (1, 0, 2)).reshape(n, num_relations * n)
    adj_ext = jnp.concatenate([jnp.eye(n, dtype=jnp.float32), adj_cat], axis=1)

    # Edge multiplicity matrix for the attention softmax grouping (per target node).
    cnt = jnp.zeros((n, n), jnp.float32).at[dst, src].add(1.0)

    # Block-diag(x, ..., x) and sublane-stacked [W_root; W_rel_*]: messages come out of
    # one matmul already row-stacked, no in-kernel staging.
    xbd = _blockdiag([node_features] * (num_relations + 1))
    w_stack = jnp.concatenate(
        [params["w_root"]] + [params["w_rel"][r] for r in range(num_relations)], axis=0)

    # Duplicate the RGCN operands block-diagonally so hbd = blockdiag(h, h) (one copy per
    # attention head) falls out of the same two matmuls.
    adj2 = _blockdiag([adj_ext] * heads)              # (2n, 2*(R+1)*n)
    xbd2 = _blockdiag([xbd] * heads)                  # (2*(R+1)*n, 2*(R+1)*g)
    wstk2 = _blockdiag([w_stack] * heads)             # (2*(R+1)*g, 2*h1)
    cnt2 = _blockdiag([cnt] * heads)                  # (2n, 2n)

    # Per-head-stacked projection weights; fold 1/sqrt(hd) into q, b_root into all biases.
    scale = 1.0 / (head_dim ** 0.5)

    def head_stack(w):                                 # (h1, out_attn) -> (heads*h1, hd)
        return jnp.concatenate(
            [w[:, h * head_dim:(h + 1) * head_dim] for h in range(heads)], axis=0)

    w_proj = jnp.concatenate(
        [head_stack(params["wq"]) * scale,
         head_stack(params["wk"]),
         head_stack(params["wv"]),
         head_stack(params["wskip"])], axis=1)         # (2*h1, 4*hd)

    def folded_bias(wfull, bfull, hidx, s=1.0):        # b_root folded; (1, hd)
        lo, hi = hidx * head_dim, (hidx + 1) * head_dim
        return (params["b_root"] @ wfull[:, lo:hi] + bfull[:, lo:hi]) * s

    b_rows = []
    for hidx in range(heads):
        row = jnp.concatenate(
            [folded_bias(params["wq"], params["bq"], hidx, scale),
             folded_bias(params["wk"], params["bk"], hidx),
             folded_bias(params["wv"], params["bv"], hidx),
             folded_bias(params["wskip"], params["bskip"], hidx)], axis=1)
        b_rows.append(jnp.tile(row, (n, 1)))
    b_proj = jnp.concatenate(b_rows, axis=0)           # (2n, 4*hd)

    cb_pack = jnp.concatenate([cnt2, b_proj], axis=1)  # (2n, 2n + 4*hd)
    bn_pack = jnp.concatenate([params["bn_gamma"], params["bn_beta"]], axis=1)

    kern = functools.partial(fused_gnn_kernel, n=n, heads=heads, head_dim=head_dim,
                             out_attn=out_attn, eps=1e-5, slope=0.01)
    inputs = (adj2, xbd2, wstk2, w_proj, cb_pack, bn_pack)
    return pl.pallas_call(
        kern,
        out_shape=jax.ShapeDtypeStruct((n, out_attn), jnp.float32),
        grid=(1,),
        in_specs=[_full_spec(a.shape) for a in inputs],
        out_specs=_full_spec((n, out_attn)),
        compiler_params=pltpu.CompilerParams(dimension_semantics=("arbitrary",)),
    )(*inputs)


# --------------------------------------------------------------------------
# Pure-JAX reference (same math) for a sanity check.
# --------------------------------------------------------------------------
def gnn_reference(params, node_features, edge_index, edge_type,
                  *, num_relations, heads, head_dim):
    n = node_features.shape[0]
    src, dst = edge_index[0], edge_index[1]
    adj = jnp.zeros((num_relations, n, n), jnp.float32).at[edge_type, dst, src].add(1.0)
    adj_norm = adj / jnp.maximum(adj.sum(-1, keepdims=True), 1.0)
    cnt = jnp.zeros((n, n), jnp.float32).at[dst, src].add(1.0)

    x = node_features
    x1 = x @ params["w_root"] + params["b_root"]
    for r in range(num_relations):
        x1 = x1 + adj_norm[r] @ (x @ params["w_rel"][r])

    q = x1 @ params["wq"] + params["bq"]
    k = x1 @ params["wk"] + params["bk"]
    v = x1 @ params["wv"] + params["bv"]
    skip = x1 @ params["wskip"] + params["bskip"]
    outs = []
    for h in range(heads):
        lo, hi = h * head_dim, (h + 1) * head_dim
        s = (q[:, lo:hi] @ k[:, lo:hi].T) / (head_dim ** 0.5)
        s = jnp.where(cnt > 0, s, -1e30)
        p = jnp.exp(s - s.max(-1, keepdims=True)) * cnt
        denom = p.sum(-1, keepdims=True)
        agg = jnp.where(denom > 0, (p @ v[:, lo:hi]) / jnp.maximum(denom, 1e-30), 0.0)
        outs.append(agg)
    x2 = jnp.concatenate(outs, axis=-1) + skip

    mean = x2.mean(0, keepdims=True)
    var = ((x2 - mean) ** 2).mean(0, keepdims=True)
    y = (x2 - mean) / jnp.sqrt(var + 1e-5) * params["bn_gamma"] + params["bn_beta"]
    return jnp.where(y > 0, y, 0.01 * y)


if __name__ == "__main__":
    # Small synthetic problem consistent with the module's forward.
    N = 16            # nodes
    G_DIM = 8         # input node feature dim
    H1_DIM = 16       # RGCN output dim
    H2_DIM = 8        # TransformerConv per-head dim
    HEADS = 2         # graph_transformer_nheads
    NUM_REL = 3       # num_relations
    E = 40            # edges

    key = jax.random.PRNGKey(0)
    ks = jax.random.split(key, 16)

    node_features = jax.random.normal(ks[0], (N, G_DIM), jnp.float32)
    node_type = jax.random.randint(ks[1], (N,), 0, 2)             # unused in forward
    edge_index = jax.random.randint(ks[2], (2, E), 0, N)          # [src; dst]
    edge_type = jax.random.randint(ks[3], (E,), 0, NUM_REL)

    out_attn = HEADS * H2_DIM
    params = {
        # RGCNConv
        "w_root": 0.1 * jax.random.normal(ks[4], (G_DIM, H1_DIM), jnp.float32),
        "b_root": 0.1 * jax.random.normal(ks[5], (1, H1_DIM), jnp.float32),
        "w_rel": 0.1 * jax.random.normal(ks[6], (NUM_REL, G_DIM, H1_DIM), jnp.float32),
        # TransformerConv
        "wq": 0.1 * jax.random.normal(ks[7], (H1_DIM, out_attn), jnp.float32),
        "bq": 0.1 * jax.random.normal(ks[8], (1, out_attn), jnp.float32),
        "wk": 0.1 * jax.random.normal(ks[9], (H1_DIM, out_attn), jnp.float32),
        "bk": 0.1 * jax.random.normal(ks[10], (1, out_attn), jnp.float32),
        "wv": 0.1 * jax.random.normal(ks[11], (H1_DIM, out_attn), jnp.float32),
        "bv": 0.1 * jax.random.normal(ks[12], (1, out_attn), jnp.float32),
        "wskip": 0.1 * jax.random.normal(ks[13], (H1_DIM, out_attn), jnp.float32),
        "bskip": 0.1 * jax.random.normal(ks[14], (1, out_attn), jnp.float32),
        # BatchNorm1d (default init: gamma=1, beta=0)
        "bn_gamma": jnp.ones((1, out_attn), jnp.float32),
        "bn_beta": jnp.zeros((1, out_attn), jnp.float32),
    }

    out = gnn_forward(params, node_features, node_type, edge_index, edge_type,
                      num_relations=NUM_REL, heads=HEADS, head_dim=H2_DIM)
    out = jax.block_until_ready(out)

    ref = gnn_reference(params, node_features, edge_index, edge_type,
                        num_relations=NUM_REL, heads=HEADS, head_dim=H2_DIM)
    assert out.shape == (N, out_attn)
    assert jnp.allclose(out, ref, atol=1e-2, rtol=1e-2)

    print("KERNEL_OK")
</pallas_src>

<mosaic_0001>
module attributes {stable_mosaic.version = 11 : i64} {
  func.func @fused_gnn_kernel(%arg0: i32, %arg1: memref<32x128xf32, #tpu.memory_space<vmem>>, %arg2: memref<128x64xf32, #tpu.memory_space<vmem>>, %arg3: memref<64x32xf32, #tpu.memory_space<vmem>>, %arg4: memref<32x32xf32, #tpu.memory_space<vmem>>, %arg5: memref<32x64xf32, #tpu.memory_space<vmem>>, %arg6: memref<1x32xf32, #tpu.memory_space<vmem>>, %arg7: memref<16x16xf32, #tpu.memory_space<vmem>>) attributes {dimension_semantics = [#tpu.dimension_semantics<arbitrary>], iteration_bounds = array<i64: 1>, scalar_prefetch = 0 : i64, scratch_operands = 0 : i64, tpu.core_type = #tpu.core_type<tc>, window_params = [{pipeline_mode = #tpu.pipeline_mode<synchronous>, transform_indices = @transform_0, window_bounds = array<i64: 32, 128>}, {pipeline_mode = #tpu.pipeline_mode<synchronous>, transform_indices = @transform_1, window_bounds = array<i64: 128, 64>}, {pipeline_mode = #tpu.pipeline_mode<synchronous>, transform_indices = @transform_2, window_bounds = array<i64: 64, 32>}, {pipeline_mode = #tpu.pipeline_mode<synchronous>, transform_indices = @transform_3, window_bounds = array<i64: 32, 32>}, {pipeline_mode = #tpu.pipeline_mode<synchronous>, transform_indices = @transform_4, window_bounds = array<i64: 32, 64>}, {pipeline_mode = #tpu.pipeline_mode<synchronous>, transform_indices = @transform_5, window_bounds = array<i64: 1, 32>}, {pipeline_mode = #tpu.pipeline_mode<synchronous>, transform_indices = @transform_6, window_bounds = array<i64: 16, 16>}]} {
    %c0 = arith.constant 0 : index
    %c0_0 = arith.constant 0 : index
    %0 = vector.load %arg2[%c0, %c0_0] : memref<128x64xf32, #tpu.memory_space<vmem>>, vector<128x64xf32>
    %c0_1 = arith.constant 0 : index
    %c0_2 = arith.constant 0 : index
    %1 = vector.load %arg3[%c0_1, %c0_2] : memref<64x32xf32, #tpu.memory_space<vmem>>, vector<64x32xf32>
    %cst = arith.constant dense<0.000000e+00> : vector<128x32xf32>
    %2 = tpu.matmul %0, %1, %cst {dimension_numbers = #tpu.dot_dimension_numbers<[1], [0], [0], [1], [0, 0, 1, 1], [], []>} : vector<128x64xf32>, vector<64x32xf32>, vector<128x32xf32> -> vector<128x32xf32>
    %c0_3 = arith.constant 0 : index
    %c0_4 = arith.constant 0 : index
    %3 = vector.load %arg1[%c0_3, %c0_4] : memref<32x128xf32, #tpu.memory_space<vmem>>, vector<32x128xf32>
    %cst_5 = arith.constant dense<0.000000e+00> : vector<32x32xf32>
    %4 = tpu.matmul %3, %2, %cst_5 {dimension_numbers = #tpu.dot_dimension_numbers<[1], [0], [0], [1], [0, 0, 1, 1], [], []>} : vector<32x128xf32>, vector<128x32xf32>, vector<32x32xf32> -> vector<32x32xf32>
    %c0_6 = arith.constant 0 : index
    %c0_7 = arith.constant 0 : index
    %5 = vector.load %arg5[%c0_6, %c0_7] : memref<32x64xf32, #tpu.memory_space<vmem>>, vector<32x32xf32>
    %c0_8 = arith.constant 0 : index
    %c32 = arith.constant 32 : index
    %6 = vector.load %arg5[%c0_8, %c32] : memref<32x64xf32, #tpu.memory_space<vmem>>, vector<32x32xf32>
    %c0_9 = arith.constant 0 : index
    %c0_10 = arith.constant 0 : index
    %7 = vector.load %arg4[%c0_9, %c0_10] : memref<32x32xf32, #tpu.memory_space<vmem>>, vector<32x32xf32>
    %cst_11 = arith.constant dense<0.000000e+00> : vector<32x32xf32>
    %8 = tpu.matmul %4, %7, %cst_11 {dimension_numbers = #tpu.dot_dimension_numbers<[1], [0], [0], [1], [0, 0, 1, 1], [], []>} : vector<32x32xf32>, vector<32x32xf32>, vector<32x32xf32> -> vector<32x32xf32>
    %9 = arith.addf %8, %6 : vector<32x32xf32>
    %10 = vector.extract_strided_slice %9 {offsets = [0, 0], sizes = [32, 8], strides = [1, 1]} : vector<32x32xf32> to vector<32x8xf32>
    %11 = vector.extract_strided_slice %9 {offsets = [0, 8], sizes = [32, 8], strides = [1, 1]} : vector<32x32xf32> to vector<32x8xf32>
    %12 = vector.extract_strided_slice %9 {offsets = [0, 16], sizes = [32, 8], strides = [1, 1]} : vector<32x32xf32> to vector<32x8xf32>
    %13 = vector.extract_strided_slice %9 {offsets = [0, 24], sizes = [32, 8], strides = [1, 1]} : vector<32x32xf32> to vector<32x8xf32>
    %14 = tpu.transpose %11, [1, 0] : vector<32x8xf32> -> vector<8x32xf32>
    %cst_12 = arith.constant dense<0.000000e+00> : vector<32x32xf32>
    %15 = tpu.matmul %10, %14, %cst_12 {dimension_numbers = #tpu.dot_dimension_numbers<[1], [0], [0], [1], [0, 0, 1, 1], [], []>} : vector<32x8xf32>, vector<8x32xf32>, vector<32x32xf32> -> vector<32x32xf32>
    %cst_13 = arith.constant dense<0xFF800000> : vector<32xf32>
    %16 = vector.multi_reduction <maximumf>, %15, %cst_13 [1] : vector<32x32xf32> to vector<32xf32>
    %17 = vector.shape_cast %16 : vector<32xf32> to vector<32x1xf32>
    %18 = vector.broadcast %17 : vector<32x1xf32> to vector<32x32xf32>
    %19 = arith.subf %15, %18 : vector<32x32xf32>
    %20 = math.exp %19 : vector<32x32xf32>
    %21 = arith.mulf %20, %5 : vector<32x32xf32>
    %cst_14 = arith.constant dense<0.000000e+00> : vector<32xf32>
    %22 = vector.multi_reduction <add>, %21, %cst_14 [1] : vector<32x32xf32> to vector<32xf32>
    %23 = vector.shape_cast %22 : vector<32xf32> to vector<32x1xf32>
    %cst_15 = arith.constant dense<0.000000e+00> : vector<32x8xf32>
    %24 = tpu.matmul %21, %12, %cst_15 {dimension_numbers = #tpu.dot_dimension_numbers<[1], [0], [0], [1], [0, 0, 1, 1], [], []>} : vector<32x32xf32>, vector<32x8xf32>, vector<32x8xf32> -> vector<32x8xf32>
    %cst_16 = arith.constant 1.000000e-30 : f32
    %25 = vector.broadcast %cst_16 : f32 to vector<32x1xf32>
    %26 = arith.maximumf %23, %25 : vector<32x1xf32>
    %27 = tpu.reciprocal %26 {approx = true} : vector<32x1xf32> -> vector<32x1xf32>
    %28 = vector.broadcast %27 : vector<32x1xf32> to vector<32x8xf32>
    %29 = arith.mulf %24, %28 : vector<32x8xf32>
    %30 = arith.addf %29, %13 : vector<32x8xf32>
    %31 = vector.extract_strided_slice %30 {offsets = [0, 0], sizes = [16, 8], strides = [1, 1]} : vector<32x8xf32> to vector<16x8xf32>
    %32 = vector.extract_strided_slice %30 {offsets = [16, 0], sizes = [16, 8], strides = [1, 1]} : vector<32x8xf32> to vector<16x8xf32>
    %33 = tpu.concatenate %31, %32 in 1 : vector<16x8xf32>, vector<16x8xf32> -> vector<16x16xf32>
    %cst_17 = arith.constant dense<0.000000e+00> : vector<16xf32>
    %34 = vector.multi_reduction <add>, %33, %cst_17 [0] : vector<16x16xf32> to vector<16xf32>
    %35 = vector.shape_cast %34 : vector<16xf32> to vector<1x16xf32>
    %cst_18 = arith.constant 6.250000e-02 : f32
    %36 = vector.broadcast %cst_18 : f32 to vector<1x16xf32>
    %37 = arith.mulf %35, %36 : vector<1x16xf32>
    %38 = arith.mulf %33, %33 : vector<16x16xf32>
    %cst_19 = arith.constant dense<0.000000e+00> : vector<16xf32>
    %39 = vector.multi_reduction <add>, %38, %cst_19 [0] : vector<16x16xf32> to vector<16xf32>
    %40 = vector.shape_cast %39 : vector<16xf32> to vector<1x16xf32>
    %cst_20 = arith.constant 6.250000e-02 : f32
    %41 = vector.broadcast %cst_20 : f32 to vector<1x16xf32>
    %42 = arith.mulf %40, %41 : vector<1x16xf32>
    %43 = arith.mulf %37, %37 : vector<1x16xf32>
    %44 = arith.subf %42, %43 : vector<1x16xf32>
    %c0_21 = arith.constant 0 : index
    %c0_22 = arith.constant 0 : index
    %45 = vector.load %arg6[%c0_21, %c0_22] : memref<1x32xf32, #tpu.memory_space<vmem>>, vector<1x16xf32>
    %c0_23 = arith.constant 0 : index
    %c16 = arith.constant 16 : index
    %46 = vector.load %arg6[%c0_23, %c16] : memref<1x32xf32, #tpu.memory_space<vmem>>, vector<1x16xf32>
    %47 = vector.broadcast %37 : vector<1x16xf32> to vector<16x16xf32>
    %48 = arith.subf %33, %47 : vector<16x16xf32>
    %cst_24 = arith.constant 9.99999974E-6 : f32
    %49 = vector.broadcast %cst_24 : f32 to vector<1x16xf32>
    %50 = arith.addf %44, %49 : vector<1x16xf32>
    %51 = math.rsqrt %50 : vector<1x16xf32>
    %52 = vector.broadcast %51 : vector<1x16xf32> to vector<16x16xf32>
    %53 = arith.mulf %48, %52 : vector<16x16xf32>
    %54 = vector.broadcast %45 : vector<1x16xf32> to vector<16x16xf32>
    %55 = arith.mulf %53, %54 : vector<16x16xf32>
    %56 = vector.broadcast %46 : vector<1x16xf32> to vector<16x16xf32>
    %57 = arith.addf %55, %56 : vector<16x16xf32>
    %cst_25 = arith.constant 0.000000e+00 : f32
    %58 = vector.broadcast %cst_25 : f32 to vector<16x16xf32>
    %59 = arith.cmpf ogt, %57, %58 : vector<16x16xf32>
    %cst_26 = arith.constant 0.00999999977 : f32
    %60 = vector.broadcast %cst_26 : f32 to vector<16x16xf32>
    %61 = arith.mulf %60, %57 : vector<16x16xf32>
    %62 = arith.select %59, %57, %61 : vector<16x16xi1>, vector<16x16xf32>
    %c0_27 = arith.constant 0 : index
    %c0_28 = arith.constant 0 : index
    %63 = vector.load %arg7[%c0_27, %c0_28] : memref<16x16xf32, #tpu.memory_space<vmem>>, vector<16x16xf32>
    tpu.vector_store %arg7[%c0_27, %c0_28], %62 {strides = array<i32>} : memref<16x16xf32, #tpu.memory_space<vmem>>, vector<16x16xf32>,
    return
  }
  func.func @transform_0(%arg0: i32) -> (i32, i32) {
    %c0_i32 = arith.constant 0 : i32
    %c0_i32_0 = arith.constant 0 : i32
    %c0_i32_1 = arith.constant 0 : i32
    return %c0_i32, %c0_i32_0 : i32, i32
  }
  func.func @transform_1(%arg0: i32) -> (i32, i32) {
    %c0_i32 = arith.constant 0 : i32
    %c0_i32_0 = arith.constant 0 : i32
    %c0_i32_1 = arith.constant 0 : i32
    return %c0_i32, %c0_i32_0 : i32, i32
  }
  func.func @transform_2(%arg0: i32) -> (i32, i32) {
    %c0_i32 = arith.constant 0 : i32
    %c0_i32_0 = arith.constant 0 : i32
    %c0_i32_1 = arith.constant 0 : i32
    return %c0_i32, %c0_i32_0 : i32, i32
  }
  func.func @transform_3(%arg0: i32) -> (i32, i32) {
    %c0_i32 = arith.constant 0 : i32
    %c0_i32_0 = arith.constant 0 : i32
    %c0_i32_1 = arith.constant 0 : i32
    return %c0_i32, %c0_i32_0 : i32, i32
  }
  func.func @transform_4(%arg0: i32) -> (i32, i32) {
    %c0_i32 = arith.constant 0 : i32
    %c0_i32_0 = arith.constant 0 : i32
    %c0_i32_1 = arith.constant 0 : i32
    return %c0_i32, %c0_i32_0 : i32, i32
  }
  func.func @transform_5(%arg0: i32) -> (i32, i32) {
    %c0_i32 = arith.constant 0 : i32
    %c0_i32_0 = arith.constant 0 : i32
    %c0_i32_1 = arith.constant 0 : i32
    return %c0_i32, %c0_i32_0 : i32, i32
  }
  func.func @transform_6(%arg0: i32) -> (i32, i32) {
    %c0_i32 = arith.constant 0 : i32
    %c0_i32_0 = arith.constant 0 : i32
    %c0_i32_1 = arith.constant 0 : i32
    return %c0_i32, %c0_i32_0 : i32, i32
  }
}

</mosaic_0001>

<llo_original>
// kernel: tpu_custom_call.1
$region0: #{tpu_custom_call.1}
  #allocation0 [shape = 'u32[]', space=smem, size = 0x4, offset = 0x4, fixed_abs, tag = 'smem constant byte address 0x4 - core index']
  #allocation1 [shape = 'u32[72,128]{1,0:T(1,128)}', space=vmem, size = 0x9000, scoped, tag = 'internal scratch']
  %s0 = inlined_call_operand.vmem [shape: f32[32,128], index: 0, kind: input, shape index: {}]
  %s1 = inlined_call_operand.vmem [shape: f32[128,64], index: 1, kind: input, shape index: {}]
  %s2 = inlined_call_operand.vmem [shape: f32[64,32], index: 2, kind: input, shape index: {}]
  %s3 = inlined_call_operand.vmem [shape: f32[32,32], index: 3, kind: input, shape index: {}]
  %s4 = inlined_call_operand.vmem [shape: f32[32,64], index: 4, kind: input, shape index: {}]
  %s5 = inlined_call_operand.vmem [shape: f32[1,32], index: 5, kind: input, shape index: {}]
  %s6 = inlined_call_operand.hbm [shape: f32[16,16], index: 6, kind: output, shape index: {}]
  %s7 = sld [smem:[#allocation0]]
  $region34: #{tpu_custom_call.1} parent=0
    _
  %s9 = ssub.s32 1, %s7
  %s10 = scalar_select 0, %s9, %s7
  $region1: #{tpu_custom_call.1} parent=0
    #allocation2 [shape = 'u8[8192]{0}', space=vmem, size = 0x2000, scoped, tag = 'output window, operand 0, single buffered']
    #allocation3 [shape = 's32[1]{0}', space=sflag, size = 0x4, scoped, tag = 'scoped memory for tpu_custom_call.1']
    %11 = vsyncpa [#allocation3], 0
    // Predicated region
    $region2: #{tpu_custom_call.1} parent=1 // pred_check
      _
    $region3: #{tpu_custom_call.1} parent=1 // pred_check_branch
      %13 = sbr.rel (0) target = $region5
    $region4: #{tpu_custom_call.1} parent=1 // pred_region
      _
    $region5: #{tpu_custom_call.1} parent=1 // pred_fallthru
      _
    // Predicated region
    $region6: #{tpu_custom_call.1} parent=1 // pred_check
      _
    $region7: #{tpu_custom_call.1} parent=1 // pred_check_branch
      %15 = sbr.rel (0) target = $region9
    $region8: #{tpu_custom_call.1} parent=1 // pred_region
      _
    $region9: #{tpu_custom_call.1} parent=1 // pred_fallthru
      _
    // Predicated region
    $region10: #{tpu_custom_call.1} parent=1 // pred_check
      _
    $region11: #{tpu_custom_call.1} parent=1 // pred_check_branch
      %17 = sbr.rel (0) target = $region13
    $region12: #{tpu_custom_call.1} parent=1 // pred_region
      _
    $region13: #{tpu_custom_call.1} parent=1 // pred_fallthru
      _
    // Predicated region
    $region14: #{tpu_custom_call.1} parent=1 // pred_check
      _
    $region15: #{tpu_custom_call.1} parent=1 // pred_check_branch
      %19 = sbr.rel (0) target = $region17
    $region16: #{tpu_custom_call.1} parent=1 // pred_region
      _
    $region17: #{tpu_custom_call.1} parent=1 // pred_fallthru
      _
    // Predicated region
    $region18: #{tpu_custom_call.1} parent=1 // pred_check
      _
    $region19: #{tpu_custom_call.1} parent=1 // pred_check_branch
      %21 = sbr.rel (0) target = $region21
    $region20: #{tpu_custom_call.1} parent=1 // pred_region
      _
    $region21: #{tpu_custom_call.1} parent=1 // pred_fallthru
      _
    // Predicated region
    $region22: #{tpu_custom_call.1} parent=1 // pred_check
      _
    $region23: #{tpu_custom_call.1} parent=1 // pred_check_branch
      %23 = sbr.rel (0) target = $region25
    $region24: #{tpu_custom_call.1} parent=1 // pred_region
      _
    $region25: #{tpu_custom_call.1} parent=1 // pred_fallthru
      _
    %v24 = vld [vmem:[%s1] sm:$0xff]
    %v25 = vld [vmem:[%s1 + $0x8] sm:$0xff]
    %v26 = vld [vmem:[%s1 + $0x10] sm:$0xff]
    %v27 = vld [vmem:[%s1 + $0x18] sm:$0xff]
    %v28 = vld [vmem:[%s1 + $0x20] sm:$0xff]
    %v29 = vld [vmem:[%s1 + $0x28] sm:$0xff]
    %v30 = vld [vmem:[%s1 + $0x30] sm:$0xff]
    %v31 = vld [vmem:[%s1 + $0x38] sm:$0xff]
    %v32 = vld [vmem:[%s1 + $0x40] sm:$0xff]
    %v33 = vld [vmem:[%s1 + $0x48] sm:$0xff]
    %v34 = vld [vmem:[%s1 + $0x50] sm:$0xff]
    %v35 = vld [vmem:[%s1 + $0x58] sm:$0xff]
    %v36 = vld [vmem:[%s1 + $0x60] sm:$0xff]
    %v37 = vld [vmem:[%s1 + $0x68] sm:$0xff]
    %v38 = vld [vmem:[%s1 + $0x70] sm:$0xff]
    %v39 = vld [vmem:[%s1 + $0x78] sm:$0xff]
    %v40 = vld [vmem:[%s2] sm:$0xff]
    %v41 = vld [vmem:[%s2 + $0x8] sm:$0xff]
    %v42 = vld [vmem:[%s2 + $0x10] sm:$0xff]
    %v43 = vld [vmem:[%s2 + $0x18] sm:$0xff]
    %v44 = vld [vmem:[%s2 + $0x20] sm:$0xff]
    %v45 = vld [vmem:[%s2 + $0x28] sm:$0xff]
    %v46 = vld [vmem:[%s2 + $0x30] sm:$0xff]
    %v47 = vld [vmem:[%s2 + $0x38] sm:$0xff]
    %vm48 = vcmask 523264
    %v50 = vsel %vm48, %v24, 0
    %v53 = vsel %vm48, %v25, 0
    %v56 = vsel %vm48, %v26, 0
    %v59 = vsel %vm48, %v27, 0
    %v62 = vsel %vm48, %v28, 0
    %v65 = vsel %vm48, %v29, 0
    %v68 = vsel %vm48, %v30, 0
    %v71 = vsel %vm48, %v31, 0
    %v74 = vsel %vm48, %v32, 0
    %v77 = vsel %vm48, %v33, 0
    %v80 = vsel %vm48, %v34, 0
    %v83 = vsel %vm48, %v35, 0
    %v86 = vsel %vm48, %v36, 0
    %v89 = vsel %vm48, %v37, 0
    %v92 = vsel %vm48, %v38, 0
    %v95 = vsel %vm48, %v39, 0
    %97 = vmatpush.msra.mxu0 0.0
    %98 = vmatpush.msra.mxu0 0.0
    %99 = vmatpush.msra.mxu0 0.0
    %100 = vmatpush.msra.mxu0 0.0
    %101 = vmatpush.msra.mxu0 0.0
    %102 = vmatpush.msra.mxu0 0.0
    %103 = vmatpush.msra.mxu0 0.0
    %104 = vmatpush.msra.mxu0 0.0
    %105 = vmatpush.msra.mxu0 %v47
    %106 = vmatpush.msra.mxu0 %v46
    %107 = vmatpush.msra.mxu0 %v45
    %108 = vmatpush.msra.mxu0 %v44
    %109 = vmatpush.msra.mxu0 %v43
    %110 = vmatpush.msra.mxu0 %v42
    %111 = vmatpush.msra.mxu0 %v41
    %112 = vmatpush.msra.mxu0 %v40
    %113 = vmatmul.f32.gmra.mxu0 %v50
    %v114 = vpop.f32.mrf.mxu0
    %v115 = vadd.f32 0.0, %v114
    %116 = vmatmul.f32.gmra.mxu0 %v53
    %v117 = vpop.f32.mrf.mxu0
    %v118 = vadd.f32 0.0, %v117
    %119 = vmatmul.f32.gmra.mxu0 %v56
    %v120 = vpop.f32.mrf.mxu0
    %v121 = vadd.f32 0.0, %v120
    %122 = vmatmul.f32.gmra.mxu0 %v59
    %v123 = vpop.f32.mrf.mxu0
    %v124 = vadd.f32 0.0, %v123
    %125 = vmatmul.f32.gmra.mxu0 %v62
    %v126 = vpop.f32.mrf.mxu0
    %v127 = vadd.f32 0.0, %v126
    %128 = vmatmul.f32.gmra.mxu0 %v65
    %v129 = vpop.f32.mrf.mxu0
    %v130 = vadd.f32 0.0, %v129
    %131 = vmatmul.f32.gmra.mxu0 %v68
    %v132 = vpop.f32.mrf.mxu0
    %v133 = vadd.f32 0.0, %v132
    %134 = vmatmul.f32.gmra.mxu0 %v71
    %v135 = vpop.f32.mrf.mxu0
    %v136 = vadd.f32 0.0, %v135
    %137 = vmatmul.f32.gmra.mxu0 %v74
    %v138 = vpop.f32.mrf.mxu0
    %v139 = vadd.f32 0.0, %v138
    %140 = vmatmul.f32.gmra.mxu0 %v77
    %v141 = vpop.f32.mrf.mxu0
    %v142 = vadd.f32 0.0, %v141
    %143 = vmatmul.f32.gmra.mxu0 %v80
    %v144 = vpop.f32.mrf.mxu0
    %v145 = vadd.f32 0.0, %v144
    %146 = vmatmul.f32.gmra.mxu0 %v83
    %v147 = vpop.f32.mrf.mxu0
    %v148 = vadd.f32 0.0, %v147
    %149 = vmatmul.f32.gmra.mxu0 %v86
    %v150 = vpop.f32.mrf.mxu0
    %v151 = vadd.f32 0.0, %v150
    %152 = vmatmul.f32.gmra.mxu0 %v89
    %v153 = vpop.f32.mrf.mxu0
    %v154 = vadd.f32 0.0, %v153
    %155 = vmatmul.f32.gmra.mxu0 %v92
    %v156 = vpop.f32.mrf.mxu0
    %v157 = vadd.f32 0.0, %v156
    %158 = vmatmul.f32.gmra.mxu0 %v95
    %v159 = vpop.f32.mrf.mxu0
    %v160 = vadd.f32 0.0, %v159
    %161 = vdwg.mxu0
    %v162 = vld [vmem:[%s0] sm:$0xff]
    %v163 = vld [vmem:[%s0 + $0x8] sm:$0xff]
    %v164 = vld [vmem:[%s0 + $0x10] sm:$0xff]
    %v165 = vld [vmem:[%s0 + $0x18] sm:$0xff]
    %166 = vmatpush.msra.mxu0 %v160
    %167 = vmatpush.msra.mxu0 %v157
    %168 = vmatpush.msra.mxu0 %v154
    %169 = vmatpush.msra.mxu0 %v151
    %170 = vmatpush.msra.mxu0 %v148
    %171 = vmatpush.msra.mxu0 %v145
    %172 = vmatpush.msra.mxu0 %v142
    %173 = vmatpush.msra.mxu0 %v139
    %174 = vmatpush.msra.mxu0 %v136
    %175 = vmatpush.msra.mxu0 %v133
    %176 = vmatpush.msra.mxu0 %v130
    %177 = vmatpush.msra.mxu0 %v127
    %178 = vmatpush.msra.mxu0 %v124
    %179 = vmatpush.msra.mxu0 %v121
    %180 = vmatpush.msra.mxu0 %v118
    %181 = vmatpush.msra.mxu0 %v115
    %182 = vmatmul.f32.gmra.mxu0 %v162
    %v183 = vpop.f32.mrf.mxu0
    %v184 = vadd.f32 0.0, %v183
    %185 = vmatmul.f32.gmra.mxu0 %v163
    %v186 = vpop.f32.mrf.mxu0
    %v187 = vadd.f32 0.0, %v186
    %188 = vmatmul.f32.gmra.mxu0 %v164
    %v189 = vpop.f32.mrf.mxu0
    %v190 = vadd.f32 0.0, %v189
    %191 = vmatmul.f32.gmra.mxu0 %v165
    %v192 = vpop.f32.mrf.mxu0
    %v193 = vadd.f32 0.0, %v192
    %194 = vdwg.mxu0
    %v195 = vld [vmem:[%s4] sm:$0xff]
    %v196 = vld [vmem:[%s4 + $0x8] sm:$0xff]
    %v197 = vld [vmem:[%s4 + $0x10] sm:$0xff]
    %v198 = vld [vmem:[%s4 + $0x18] sm:$0xff]
    %v199 = vld [vmem:[%s3] sm:$0xff]
    %v200 = vld [vmem:[%s3 + $0x8] sm:$0xff]
    %v201 = vld [vmem:[%s3 + $0x10] sm:$0xff]
    %v202 = vld [vmem:[%s3 + $0x18] sm:$0xff]
    %207 = vrot.lane.b32.xlu0 %v195, 96
    %v208 = vpop.permute.xlu0 %207
    %209 = vrot.lane.b32.xlu0 %v196, 96
    %v210 = vpop.permute.xlu0 %209
    %211 = vrot.lane.b32.xlu0 %v197, 96
    %v212 = vpop.permute.xlu0 %211
    %213 = vrot.lane.b32.xlu0 %v198, 96
    %v214 = vpop.permute.xlu0 %213
    %vm219 = vcmask 261120
    %v221 = vsel %vm219, %v184, 0
    %v224 = vsel %vm219, %v187, 0
    %v227 = vsel %vm219, %v190, 0
    %v230 = vsel %vm219, %v193, 0
    %232 = vmatpush.msra.mxu0 0.0
    %233 = vmatpush.msra.mxu0 0.0
    %234 = vmatpush.msra.mxu0 0.0
    %235 = vmatpush.msra.mxu0 0.0
    %236 = vmatpush.msra.mxu0 0.0
    %237 = vmatpush.msra.mxu0 0.0
    %238 = vmatpush.msra.mxu0 0.0
    %239 = vmatpush.msra.mxu0 0.0
    %240 = vmatpush.msra.mxu0 0.0
    %241 = vmatpush.msra.mxu0 0.0
    %242 = vmatpush.msra.mxu0 0.0
    %243 = vmatpush.msra.mxu0 0.0
    %244 = vmatpush.msra.mxu0 %v202
    %245 = vmatpush.msra.mxu0 %v201
    %246 = vmatpush.msra.mxu0 %v200
    %247 = vmatpush.msra.mxu0 %v199
    %248 = vmatmul.f32.gmra.mxu0 %v221
    %v249 = vpop.f32.mrf.mxu0
    %v250 = vadd.f32 %v208, %v249
    %251 = vmatmul.f32.gmra.mxu0 %v224
    %v252 = vpop.f32.mrf.mxu0
    %v253 = vadd.f32 %v210, %v252
    %254 = vmatmul.f32.gmra.mxu0 %v227
    %v255 = vpop.f32.mrf.mxu0
    %v256 = vadd.f32 %v212, %v255
    %257 = vmatmul.f32.gmra.mxu0 %v230
    %v258 = vpop.f32.mrf.mxu0
    %v259 = vadd.f32 %v214, %v258
    %260 = vdwg.mxu0
    %265 = vrot.lane.b32.xlu0 %v250, 120
    %v266 = vpop.permute.xlu0 %265
    %267 = vrot.lane.b32.xlu0 %v253, 120
    %v268 = vpop.permute.xlu0 %267
    %269 = vrot.lane.b32.xlu0 %v256, 120
    %v270 = vpop.permute.xlu0 %269
    %271 = vrot.lane.b32.xlu0 %v259, 120
    %v272 = vpop.permute.xlu0 %271
    %vm273 = vcmask 64512
    %v274 = vsel %vm273, %v250, 0
    %v276 = vsel %vm273, %v253, 0
    %v278 = vsel %vm273, %v256, 0
    %v280 = vsel %vm273, %v259, 0
    %v282 = vsel %vm273, %v266, 0
    %v284 = vsel %vm273, %v268, 0
    %v286 = vsel %vm273, %v270, 0
    %v288 = vsel %vm273, %v272, 0
    %290 = vmatpush.xpose.msra.mxu0 0.0
    %291 = vmatpush.xpose.msra.mxu0 0.0
    %292 = vmatpush.xpose.msra.mxu0 0.0
    %293 = vmatpush.xpose.msra.mxu0 0.0
    %294 = vmatpush.xpose.msra.mxu0 0.0
    %295 = vmatpush.xpose.msra.mxu0 0.0
    %296 = vmatpush.xpose.msra.mxu0 0.0
    %297 = vmatpush.xpose.msra.mxu0 0.0
    %298 = vmatpush.xpose.msra.mxu0 0.0
    %299 = vmatpush.xpose.msra.mxu0 0.0
    %300 = vmatpush.xpose.msra.mxu0 0.0
    %301 = vmatpush.xpose.msra.mxu0 0.0
    %302 = vmatpush.xpose.msra.mxu0 %v288
    %303 = vmatpush.xpose.msra.mxu0 %v286
    %304 = vmatpush.xpose.msra.mxu0 %v284
    %305 = vmatpush.xpose.msra.mxu0 %v282
    %306 = vmatmul.f32.gmra.mxu0 %v274
    %v307 = vpop.f32.mrf.mxu0
    %v308 = vadd.f32 0.0, %v307
    %309 = vmatmul.f32.gmra.mxu0 %v276
    %v310 = vpop.f32.mrf.mxu0
    %v311 = vadd.f32 0.0, %v310
    %312 = vmatmul.f32.gmra.mxu0 %v278
    %v313 = vpop.f32.mrf.mxu0
    %v314 = vadd.f32 0.0, %v313
    %315 = vmatmul.f32.gmra.mxu0 %v280
    %v316 = vpop.f32.mrf.mxu0
    %v317 = vadd.f32 0.0, %v316
    %318 = vdwg.mxu0
    %v319 = vsel %vm219, %v308, -inf
    %320 = vmax.xlane.f32.xlu0 %v319
    %v321 = vpop.xlane.xlu0 %320
    %v322 = vsel %vm219, %v311, -inf
    %323 = vmax.xlane.f32.xlu0 %v322
    %v324 = vpop.xlane.xlu0 %323
    %v325 = vsel %vm219, %v314, -inf
    %326 = vmax.xlane.f32.xlu0 %v325
    %v327 = vpop.xlane.xlu0 %326
    %v328 = vsel %vm219, %v317, -inf
    %329 = vmax.xlane.f32.xlu0 %v328
    %v330 = vpop.xlane.xlu0 %329
    %v331 = vsub.f32 %v308, %v321
    %v332 = vsub.f32 %v311, %v324
    %v333 = vsub.f32 %v314, %v327
    %v334 = vsub.f32 %v317, %v330
    %v335 = vmul.f32 %v331, 1.442695
    %v336 = vpow.pop %v335
    %v337 = vmul.f32 %v332, 1.442695
    %v338 = vpow.pop %v337
    %v339 = vmul.f32 %v333, 1.442695
    %v340 = vpow.pop %v339
    %v341 = vmul.f32 %v334, 1.442695
    %v342 = vpow.pop %v341
    %v343 = vmul.f32 %v336, %v195
    %v344 = vmul.f32 %v338, %v196
    %v345 = vmul.f32 %v340, %v197
    %v346 = vmul.f32 %v342, %v198
    %v347 = vsel %vm219, %v343, 0.0
    %348 = vadd.xlane.f32.xlu0 %v347
    %v349 = vpop.xlane.xlu0 %348
    %v350 = vsel %vm219, %v344, 0.0
    %351 = vadd.xlane.f32.xlu0 %v350
    %v352 = vpop.xlane.xlu0 %351
    %v353 = vsel %vm219, %v345, 0.0
    %354 = vadd.xlane.f32.xlu0 %v353
    %v355 = vpop.xlane.xlu0 %354
    %v356 = vsel %vm219, %v346, 0.0
    %357 = vadd.xlane.f32.xlu0 %v356
    %v358 = vpop.xlane.xlu0 %357
    %359 = vrot.lane.b32.xlu0 %v250, 112
    %v360 = vpop.permute.xlu0 %359
    %361 = vrot.lane.b32.xlu0 %v253, 112
    %v362 = vpop.permute.xlu0 %361
    %363 = vrot.lane.b32.xlu0 %v256, 112
    %v364 = vpop.permute.xlu0 %363
    %365 = vrot.lane.b32.xlu0 %v259, 112
    %v366 = vpop.permute.xlu0 %365
    %v372 = vsel %vm219, %v343, 0
    %v375 = vsel %vm219, %v344, 0
    %v378 = vsel %vm219, %v345, 0
    %v381 = vsel %vm219, %v346, 0
    %383 = vmatpush.msra.mxu0 0.0
    %384 = vmatpush.msra.mxu0 0.0
    %385 = vmatpush.msra.mxu0 0.0
    %386 = vmatpush.msra.mxu0 0.0
    %387 = vmatpush.msra.mxu0 0.0
    %388 = vmatpush.msra.mxu0 0.0
    %389 = vmatpush.msra.mxu0 0.0
    %390 = vmatpush.msra.mxu0 0.0
    %391 = vmatpush.msra.mxu0 0.0
    %392 = vmatpush.msra.mxu0 0.0
    %393 = vmatpush.msra.mxu0 0.0
    %394 = vmatpush.msra.mxu0 0.0
    %395 = vmatpush.msra.mxu0 %v366
    %396 = vmatpush.msra.mxu0 %v364
    %397 = vmatpush.msra.mxu0 %v362
    %398 = vmatpush.msra.mxu0 %v360
    %399 = vmatmul.f32.gmra.mxu0 %v372
    %v400 = vpop.f32.mrf.mxu0
    %v401 = vadd.f32 0.0, %v400
    %402 = vmatmul.f32.gmra.mxu0 %v375
    %v403 = vpop.f32.mrf.mxu0
    %v404 = vadd.f32 0.0, %v403
    %405 = vmatmul.f32.gmra.mxu0 %v378
    %v406 = vpop.f32.mrf.mxu0
    %v407 = vadd.f32 0.0, %v406
    %408 = vmatmul.f32.gmra.mxu0 %v381
    %v409 = vpop.f32.mrf.mxu0
    %v410 = vadd.f32 0.0, %v409
    %411 = vdwg.mxu0
    %v412 = vmax.f32 %v349, 1e-30
    %v413 = vmax.f32 %v352, 1e-30
    %v414 = vmax.f32 %v355, 1e-30
    %v415 = vmax.f32 %v358, 1e-30
    %v416 = vrcp.pop %v412
    %v417 = vrcp.pop %v413
    %v418 = vrcp.pop %v414
    %v419 = vrcp.pop %v415
    %v420 = vmul.f32 %v401, %v416
    %v421 = vmul.f32 %v404, %v417
    %v422 = vmul.f32 %v407, %v418
    %v423 = vmul.f32 %v410, %v419
    %424 = vrot.lane.b32.xlu0 %v250, 104
    %v425 = vpop.permute.xlu0 %424
    %426 = vrot.lane.b32.xlu0 %v253, 104
    %v427 = vpop.permute.xlu0 %426
    %428 = vrot.lane.b32.xlu0 %v256, 104
    %v429 = vpop.permute.xlu0 %428
    %430 = vrot.lane.b32.xlu0 %v259, 104
    %v431 = vpop.permute.xlu0 %430
    %v436 = vadd.f32 %v420, %v425
    %v437 = vadd.f32 %v421, %v427
    %v438 = vadd.f32 %v422, %v429
    %v439 = vadd.f32 %v423, %v431
    %442 = vrot.lane.b32.xlu0 %v438, 8
    %v443 = vpop.permute.xlu0 %442
    %444 = vrot.lane.b32.xlu0 %v439, 8
    %v445 = vpop.permute.xlu0 %444
    %v448 = vsel %vm273, %v436, %v443
    %v449 = vsel %vm273, %v437, %v445
    %vm450 = vcmask 130048
    %v451 = vsel %vm450, %v448, 0.0
    %v452 = vsel %vm450, %v449, 0.0
    %v453 = vadd.f32 %v451, %v452
    %v454 = vrot.slane %v453, 4
    %v455 = vadd.f32 %v453, %v454
    %v456 = vrot.slane %v455, 2
    %v457 = vadd.f32 %v455, %v456
    %v458 = vrot.slane %v457, 1
    %v459 = vadd.f32 %v457, %v458
    %v460 = vmul.f32 %v459, 0.0625
    %v461 = vmul.f32 %v448, %v448
    %v462 = vmul.f32 %v449, %v449
    %v463 = vsel %vm450, %v461, 0.0
    %v464 = vsel %vm450, %v462, 0.0
    %v465 = vadd.f32 %v463, %v464
    %v466 = vrot.slane %v465, 4
    %v467 = vadd.f32 %v465, %v466
    %v468 = vrot.slane %v467, 2
    %v469 = vadd.f32 %v467, %v468
    %v470 = vrot.slane %v469, 1
    %v471 = vadd.f32 %v469, %v470
    %v472 = vmul.f32 %v471, 0.0625
    %v473 = vmul.f32 %v460, %v460
    %v474 = vsub.f32 %v472, %v473
    %v475 = vld [vmem:[%s5] sm:$0x1]
    %v476 = vsub.f32 %v448, %v460
    %v477 = vsub.f32 %v449, %v460
    %v478 = vadd.f32 %v474, 1e-05
    %v479 = vrsqrt.pop %v478
    %v480 = vmul.f32 %v479, %v478
    %v481 = vmul.f32 %v480, %v479
    %v482 = vmul.f32 0.5, %v481
    %v483 = vsub.f32 1.5, %v482
    %v484 = vmul.f32 %v479, %v483
    %vm485 = vweird.f32 %v478
    %vm486 = vweird.f32 %v479
    %vm487 = vmor %vm485, %vm486
    %v488 = vsel %vm487, %v479, %v484
    %v489 = vmul.f32 %v476, %v488
    %v490 = vmul.f32 %v477, %v488
    %v492 = vperm.slane %v475, 0
    %v494 = vmul.f32 %v489, %v492
    %v495 = vmul.f32 %v490, %v492
    %496 = vrot.lane.b32.xlu0 %v492, 112
    %v497 = vpop.permute.xlu0 %496
    %v499 = vadd.f32 %v494, %v497
    %v500 = vadd.f32 %v495, %v497
    %vm501 = vcmp.gt.f32.partialorder %v499, 0.0
    %vm502 = vcmp.gt.f32.partialorder %v500, 0.0
    %v503 = vmul.f32 %v499, 0.01
    %v504 = vmul.f32 %v500, 0.01
    %v505 = vsel %vm501, %v499, %v503
    %v506 = vsel %vm502, %v500, %v504
    %507 = vst.msk [vmem:[#allocation2] sm:$0xff] %vm450, %v505
    %508 = vst.msk [vmem:[#allocation2 + $0x8] sm:$0xff] %vm450, %v506
    // Predicated region
    $region26: #{tpu_custom_call.1} parent=1 // pred_check
      _
    $region27: #{tpu_custom_call.1} parent=1 // pred_check_branch
      %510 = sbr.rel (0) target = $region29
    $region28: #{tpu_custom_call.1} parent=1 // pred_region
      %512 = vsyncadd [#allocation3], 0
      %s513 = sshll.u32 [#allocation2], 4
      %s514 = int_to_ptr.vmem [resolvable:$true] %s513
      %s515 = sshll.u32 %s6, 4
      %s516 = int_to_ptr.hbm [resolvable:$true] %s515
      %521 = dma.vmem_to_hbm [thread:$0]  %s514, 256, %s516, [#allocation3], 128, 128, 8
    $region29: #{tpu_custom_call.1} parent=1 // pred_fallthru
      _
    // Predicated region
    $region30: #{tpu_custom_call.1} parent=1 // pred_check
      _
    $region31: #{tpu_custom_call.1} parent=1 // pred_check_branch
      %523 = sbr.rel (0) target = $region33
    $region32: #{tpu_custom_call.1} parent=1 // pred_region
      %525 = dma.done [#allocation3], 256
    $region33: #{tpu_custom_call.1} parent=1 // pred_fallthru
      _
    %526 = vsyncpa [#allocation3], 1

</llo_original>
